<compile_context>
chip_gen: v7x
topology: tpu7x:2x2x1
jax: 0.10.0
libtpu: 0.0.40
codegen_flags: <defaults>
</compile_context>

<pallas_src>
import functools

import jax
import jax.numpy as jnp
from jax import lax
from jax.experimental import pallas as pl
from jax.experimental.pallas import tpu as pltpu

# ----------------------------- configuration (small shapes) -----------------------------
B = 2                  # batch
NUM_RETRIEVAL = 4
N_DB = 32              # database entries (real DBs are thousands)
D_TEXT = 64            # CLIP-like text feature dim (real module: 512)
LATENT_DIM = 128       # motion_proj output dim (real module: 512)
MAX_SEQ_LEN = 32       # real module: 240; kept a multiple of STRIDE*8 so the strided time
                       # axis is sublane-aligned for the per-row gather DMAs
STRIDE = 4
T_STRIDED = MAX_SEQ_LEN // STRIDE
KINEMATIC_COEF = 0.1
MOTION_DIM_HALF = 32   # lead / follow each
MOTION_DIM = 2 * MOTION_DIM_HALF
MUSIC_DIM = 16
T_MUSIC = 8

# Scoring N-tile: 2048 rows x 512 feats bf16 = 2 MiB per buffer at real sizes -> per-step DMA
# time dominates the ~0.35us grid-step overhead on v6e (1.4 TB/s) and v7x (3.2 TB/s) while
# staying far under scoped VMEM on all generations.  v7x can push to 4096 if still overhead-bound.
N_TILE = 2048
_LANE = 128            # DB rows padded to a multiple of 128 -> lane-dense score stores (v5e)
PROJ_GROUP_CAP = 8     # retrieved indices processed per projection grid step


# ============================ Pallas kernel 1: fused retrieval scoring ===================
def _score_kernel(coef, q_ref, db_ref, qlen_ref, dblen_ref, out_ref):
    """out[0] = (q . db^T) * exp(-|L_db - L_q| / max(L_db, L_q) * coef).

    q_ref  [1, B, D]  bf16, rows pre-normalized (unit L2) in the wrapper.
    db_ref [1, nt, D] bf16, rows pre-normalized at DB build time.
    """
    # native bf16 MXU path with f32 accumulation; contraction on dim 1 of both operands so
    # the DB tile never goes through an XLU transpose.
    raw = lax.dot_general(q_ref[0], db_ref[0],
                          dimension_numbers=(((1,), (1,)), ((), ())),
                          preferred_element_type=jnp.float32)            # [B, nt]
    ql = qlen_ref[...]                                                    # [B, 1]  f32
    dl = dblen_ref[...]                                                   # [1, nt] f32
    rel = jnp.abs(dl - ql) / jnp.maximum(dl, ql)
    out_ref[0] = raw * jnp.exp(-rel * jnp.float32(coef))                  # EUP exp


def combined_scores(q_stack_bf, db_feats, query_lengths, db_lengths_padded,
                    coef=KINEMATIC_COEF):
    """q_stack_bf [M,B,D] bf16 (unit rows), db_feats [Mdb>=M,Np,D] bf16 (unit rows)
    -> scores [M,B,Np] f32."""
    n_mod, Bq, D = q_stack_bf.shape
    N = db_feats.shape[1]
    nt = N if N <= N_TILE else N_TILE
    assert N % nt == 0, "padded DB size must divide the N tile"
    n_steps = N // nt
    qlen = query_lengths.astype(jnp.float32).reshape(Bq, 1)
    dlen = db_lengths_padded.astype(jnp.float32).reshape(1, N)
    # deeper buffering only pays off when the N axis actually has several tiles to stream
    if n_steps >= 3:
        db_spec = pl.BlockSpec((1, nt, D), lambda m, n: (m, n, 0),
                               pipeline_mode=pl.Buffered(3))
    else:
        db_spec = pl.BlockSpec((1, nt, D), lambda m, n: (m, n, 0))
    return pl.pallas_call(
        functools.partial(_score_kernel, coef),
        out_shape=jax.ShapeDtypeStruct((n_mod, Bq, N), jnp.float32),
        grid=(n_mod, n_steps),
        in_specs=[
            pl.BlockSpec((1, Bq, D), lambda m, n: (m, 0, 0)),
            db_spec,
            pl.BlockSpec((Bq, 1), lambda m, n: (0, 0)),
            pl.BlockSpec((1, nt), lambda m, n: (0, n)),
        ],
        out_specs=pl.BlockSpec((1, Bq, nt), lambda m, n: (m, 0, n)),
        compiler_params=pltpu.CompilerParams(
            dimension_semantics=("parallel", "parallel")),
    )(q_stack_bf, db_feats, qlen, dlen)


# ================== Pallas kernel 2: batched gather + motion_proj + pos embedding ========
def _proj_kernel(group, t_strided, idx_ref, m_hbm, w_ref, pb_ref, out_ref, mbuf, sems):
    """Per grid step: gather `group` retrieved motions straight from HBM via manual
    double-buffered DMAs (indices live in SMEM via scalar prefetch), then one
    (group*Ts, Dm) x (Dm, L) bf16 MXU matmul + fused (bias + pos) add, bf16 writeback."""
    step = pl.program_id(0)
    nsteps = pl.num_programs(0)

    def start_fetch(s, slot):
        for j in range(group):                       # static, small
            pltpu.make_async_copy(
                m_hbm.at[idx_ref[s * group + j]],
                mbuf.at[slot, pl.ds(j * t_strided, t_strided), :],
                sems.at[slot, j]).start()

    @pl.when(step == 0)
    def _():                                          # prime slot 0 on the first step
        start_fetch(0, 0)

    slot = lax.rem(step, 2)
    for j in range(group):                            # wait for this step's rows
        pltpu.make_async_copy(
            m_hbm.at[0],
            mbuf.at[slot, pl.ds(j * t_strided, t_strided), :],
            sems.at[slot, j]).wait()

    @pl.when(step + 1 < nsteps)
    def _():                                          # prefetch next step into the other slot
        start_fetch(step + 1, 1 - slot)

    x = mbuf[slot]                                                      # [G*Ts, Dm] bf16
    y = jnp.dot(x, w_ref[...], preferred_element_type=jnp.float32)      # MXU, f32 acc
    out_ref[...] = (y + pb_ref[...]).astype(out_ref.dtype)              # fused bias+pos, bf16


def _largest_divisor(n, cap):
    g = 1
    for c in range(1, cap + 1):
        if n % c == 0:
            g = c
    return g


def project_retrieved(indices, motions_strided, w_bf16, pos_bias_strided):
    """indices [M_total] int32; motions_strided [N, Ts, Dm] bf16; w_bf16 [Dm, L] bf16;
    pos_bias_strided [Ts, L] f32  ->  [M_total, Ts, L] bf16."""
    m_total = indices.shape[0]
    _, ts, dm = motions_strided.shape
    latent = w_bf16.shape[1]
    group = _largest_divisor(m_total, PROJ_GROUP_CAP)
    # pos+bias slab pre-tiled to the per-step output block: loop-invariant, DMA'd once.
    pb_tiled = jnp.tile(pos_bias_strided, (group, 1))                    # [G*Ts, L] f32
    out_flat = pl.pallas_call(
        functools.partial(_proj_kernel, group, ts),
        out_shape=jax.ShapeDtypeStruct((m_total * ts, latent), jnp.bfloat16),
        grid_spec=pltpu.PrefetchScalarGridSpec(
            num_scalar_prefetch=1,
            grid=(m_total // group,),
            in_specs=[
                pl.BlockSpec(memory_space=pl.ANY),                       # motions stay in HBM
                pl.BlockSpec((dm, latent), lambda g, idx: (0, 0)),       # W resident in VMEM
                pl.BlockSpec((group * ts, latent), lambda g, idx: (0, 0)),
            ],
            out_specs=pl.BlockSpec((group * ts, latent), lambda g, idx: (g, 0)),
            scratch_shapes=[
                pltpu.VMEM((2, group * ts, dm), jnp.bfloat16),           # gather double-buffer
                pltpu.SemaphoreType.DMA((2, group)),
            ]),
        # the manual double-buffer carries state across grid steps, so this axis must stay
        # sequential ("arbitrary"); batching `group` indices per step already amortizes the
        # per-step overhead and small gather DMAs.
        compiler_params=pltpu.CompilerParams(dimension_semantics=("arbitrary",)),
    )(indices, motions_strided, w_bf16, pb_tiled)
    return out_flat.reshape(m_total, ts, latent)


# ====================================== database ========================================
def make_database_and_params(key):
    ks = jax.random.split(key, 10)
    spatial_features = jax.random.normal(ks[0], (N_DB, D_TEXT), jnp.float32)
    body_features = jax.random.normal(ks[1], (N_DB, D_TEXT), jnp.float32)
    rhythm_features = jax.random.normal(ks[2], (N_DB, D_TEXT), jnp.float32)
    motion_lengths = jax.random.randint(ks[3], (N_DB,), 4, MAX_SEQ_LEN + 1).astype(jnp.int32)

    lead = jax.random.normal(ks[4], (N_DB, MAX_SEQ_LEN, MOTION_DIM_HALF), jnp.float32)
    follow = jax.random.normal(ks[5], (N_DB, MAX_SEQ_LEN, MOTION_DIM_HALF), jnp.float32)
    # zero beyond each motion's true length (== PyTorch zero-padding of variable-length DB)
    valid = (jnp.arange(MAX_SEQ_LEN)[None, :, None] < motion_lengths[:, None, None])
    combined_motions = jnp.concatenate([lead * valid, follow * valid], axis=-1)   # [N,T,Dm]
    # stride-before-projection (exact equivalence: Linear + pos-add are per-timestep), bf16.
    combined_motions_strided = combined_motions[:, ::STRIDE, :].astype(jnp.bfloat16)

    music = jax.random.normal(ks[6], (N_DB, T_MUSIC, MUSIC_DIM), jnp.float32)
    music_global = jnp.mean(music, axis=1)
    # zero-pad music features to D_TEXT so all four modalities share one fused score kernel
    # (zero padding leaves dot products and norms unchanged -> identical cosine similarity).
    music_global_pad = jnp.pad(music_global, ((0, 0), (0, D_TEXT - MUSIC_DIM)))

    feature_stack = jnp.stack(
        [spatial_features, body_features, rhythm_features, music_global_pad])     # [4, N, D]
    # normalize rows in f32 FIRST, then cast to bf16 (so the bf16 rows used in the dot are
    # the unit-norm rows), then zero-pad N up to a multiple of 128 (lane-dense score stores).
    # TODO(synk): F.cosine_similarity clamps ||x||*||y|| at eps; here each norm is clamped
    #             separately (identical except for near-zero vectors).
    inv = lax.rsqrt(jnp.maximum(jnp.sum(feature_stack * feature_stack, axis=-1,
                                        keepdims=True), jnp.float32(1e-16)))
    feature_stack = feature_stack * inv
    n_pad = -(-N_DB // _LANE) * _LANE
    feature_stack = jnp.pad(
        feature_stack, ((0, 0), (0, n_pad - N_DB), (0, 0))).astype(jnp.bfloat16)  # [4,Np,D]
    lengths_padded = jnp.pad(motion_lengths, (0, n_pad - N_DB),
                             constant_values=1).astype(jnp.float32)               # [Np]

    # deterministic synthetic parameters (nn.Linear + motion_pos_embedding)
    motion_proj_w = jax.random.normal(ks[7], (MOTION_DIM, LATENT_DIM), jnp.float32) * 0.02
    motion_proj_b = jax.random.normal(ks[8], (LATENT_DIM,), jnp.float32) * 0.02
    motion_pos_embedding = jax.random.normal(ks[9], (MAX_SEQ_LEN, LATENT_DIM), jnp.float32)
    # pre-fused, pre-strided (bias + positional embedding) slab: [Ts, L] f32
    pos_bias_strided = motion_pos_embedding[::STRIDE] + motion_proj_b[None, :]

    return dict(
        feature_stack=feature_stack,                       # [4, Np, D] bf16, unit rows
        n_real=N_DB,
        lengths_padded=lengths_padded,                      # [Np] f32 (pads = 1)
        motion_lengths=motion_lengths,                      # [N]  int32
        combined_motions_strided=combined_motions_strided,  # [N, Ts, Dm] bf16
        motion_proj_w=motion_proj_w.astype(jnp.bfloat16),   # [Dm, L] bf16
        pos_bias_strided=pos_bias_strided,                  # [Ts, L] f32
    )


# ====================================== forward ==========================================
def retrieval_forward(db, spatial_q, body_q, rhythm_q, lengths, music=None):
    """JAX/Pallas analogue of RetrievalDatabase_Duet.forward.

    spatial_q/body_q/rhythm_q: [B, D_TEXT] pre-extracted CLIP-like text features.
    lengths: [B] int target motion lengths.  music: [B, T_MUSIC, MUSIC_DIM] or None.
    """
    # TODO(synk): CLIP text encoding is an external model; queries arrive pre-featurized.
    # TODO(synk): output time length is fixed to max_seq_len // stride (JAX static shapes)
    #             instead of the data-dependent max retrieved length; valid positions match.
    Bq = spatial_q.shape[0]

    if music is not None:
        music_q = jnp.pad(jnp.mean(music, axis=1), ((0, 0), (0, D_TEXT - MUSIC_DIM)))
        q_stack = jnp.stack([spatial_q, body_q, rhythm_q, music_q])        # [4, B, D]
    else:
        q_stack = jnp.stack([spatial_q, body_q, rhythm_q])                 # [3, B, D]
    n_mod = q_stack.shape[0]

    # query inverse-norm hoisted out of the N-tile loop; queries go to the kernel in bf16.
    q_inv = lax.rsqrt(jnp.maximum(jnp.sum(q_stack * q_stack, axis=-1, keepdims=True),
                                  jnp.float32(1e-16)))
    q_stack_bf = (q_stack * q_inv).astype(jnp.bfloat16)

    # 1) fused scoring for all modalities in one kernel launch.  The FULL 4-modality DB
    #    stack is always passed (no HBM slice copy); the grid only visits M = n_mod rows.
    scores = combined_scores(q_stack_bf, db["feature_stack"], lengths,
                             db["lengths_padded"])                         # [n_mod, B, Np]
    # padded DB rows never reach the top-k
    valid_row = jnp.arange(db["feature_stack"].shape[1]) < db["n_real"]
    scores = jnp.where(valid_row[None, None, :], scores, jnp.finfo(jnp.float32).min)

    # 2) top-k per (modality, batch)
    _, idx = lax.top_k(scores, NUM_RETRIEVAL)                              # [n_mod, B, R]
    flat_idx = idx.reshape(-1).astype(jnp.int32)                           # [n_mod*B*R]

    # 3) batched gather (manual DMA) + projection + pos-embedding, all modalities at once
    re_flat = project_retrieved(flat_idx, db["combined_motions_strided"],
                                db["motion_proj_w"], db["pos_bias_strided"])
    Ts = re_flat.shape[1]
    re_all = re_flat.reshape(n_mod, Bq, NUM_RETRIEVAL, Ts, LATENT_DIM)     # bf16

    # validity masks (cheap glue): mask[..., t] = t < ceil(len / stride)
    mlens = jnp.take(db["motion_lengths"], flat_idx).reshape(n_mod, Bq, NUM_RETRIEVAL)
    strided_len = (mlens + STRIDE - 1) // STRIDE
    masks = (jnp.arange(Ts)[None, None, None, :] < strided_len[..., None]).astype(jnp.float32)

    spatial_re, body_re, rhythm_re = re_all[0], re_all[1], re_all[2]
    spatial_mask, body_mask, rhythm_mask = masks[0], masks[1], masks[2]
    if music is not None:
        music_re, music_mask = re_all[3], masks[3]
    else:
        music_re = jnp.zeros_like(spatial_re)
        music_mask = jnp.ones_like(spatial_mask)

    return {
        "re_spatial": spatial_re,
        "re_body": body_re,
        "re_rhythm": rhythm_re,
        "re_music": music_re,
        "re_spatial_mask": spatial_mask,
        "re_body_mask": body_mask,
        "re_rhythm_mask": rhythm_mask,
        "re_music_mask": music_mask,
        "re_motion": spatial_re,
        "re_mask": spatial_mask,
    }


# ===================================== demo ==============================================
if __name__ == "__main__":
    key = jax.random.PRNGKey(0)
    k_db, k_s, k_b, k_r, k_m = jax.random.split(key, 5)

    db = make_database_and_params(k_db)

    # synthetic "CLIP" query features, one per batch element, per text modality
    spatial_q = jax.random.normal(k_s, (B, D_TEXT), jnp.float32)
    body_q = jax.random.normal(k_b, (B, D_TEXT), jnp.float32)
    rhythm_q = jax.random.normal(k_r, (B, D_TEXT), jnp.float32)
    lengths = jnp.array([10, 14], dtype=jnp.int32)
    music = jax.random.normal(k_m, (B, T_MUSIC, MUSIC_DIM), jnp.float32)

    out = retrieval_forward(db, spatial_q, body_q, rhythm_q, lengths, music=music)
    out = jax.tree_util.tree_map(lambda x: x.block_until_ready(), out)

    assert out["re_spatial"].shape == (B, NUM_RETRIEVAL, T_STRIDED, LATENT_DIM)
    assert out["re_music"].shape == (B, NUM_RETRIEVAL, T_STRIDED, LATENT_DIM)
    assert out["re_spatial_mask"].shape == (B, NUM_RETRIEVAL, T_STRIDED)
    print("KERNEL_OK")
</pallas_src>

<mosaic_0001>
module attributes {stable_mosaic.version = 11 : i64} {
  func.func @_score_kernel(%arg0: i32, %arg1: i32, %arg2: memref<1x2x64xbf16, #tpu.memory_space<vmem>>, %arg3: memref<1x128x64xbf16, #tpu.memory_space<vmem>>, %arg4: memref<2x1xf32, #tpu.memory_space<vmem>>, %arg5: memref<1x128xf32, #tpu.memory_space<vmem>>, %arg6: memref<1x2x128xf32, #tpu.memory_space<vmem>>) attributes {dimension_semantics = [#tpu.dimension_semantics<parallel>, #tpu.dimension_semantics<parallel>], iteration_bounds = array<i64: 4, 1>, scalar_prefetch = 0 : i64, scratch_operands = 0 : i64, tpu.core_type = #tpu.core_type<tc>, window_params = [{transform_indices = @transform_0, window_bounds = array<i64: 1, 2, 64>}, {transform_indices = @transform_1, window_bounds = array<i64: 1, 128, 64>}, {pipeline_mode = #tpu.pipeline_mode<synchronous>, transform_indices = @transform_2, window_bounds = array<i64: 2, 1>}, {transform_indices = @transform_3, window_bounds = array<i64: 1, 128>}, {transform_indices = @transform_4, window_bounds = array<i64: 1, 2, 128>}]} {
    %c0 = arith.constant 0 : index
    %c0_0 = arith.constant 0 : index
    %c0_1 = arith.constant 0 : index
    %0 = vector.load %arg2[%c0, %c0_0, %c0_1] : memref<1x2x64xbf16, #tpu.memory_space<vmem>>, vector<1x2x64xbf16>
    %1 = vector.shape_cast %0 : vector<1x2x64xbf16> to vector<2x64xbf16>
    %c0_2 = arith.constant 0 : index
    %c0_3 = arith.constant 0 : index
    %c0_4 = arith.constant 0 : index
    %2 = vector.load %arg3[%c0_2, %c0_3, %c0_4] : memref<1x128x64xbf16, #tpu.memory_space<vmem>>, vector<1x128x64xbf16>
    %3 = vector.shape_cast %2 : vector<1x128x64xbf16> to vector<128x64xbf16>
    %cst = arith.constant dense<0.000000e+00> : vector<2x128xf32>
    %4 = tpu.matmul %1, %3, %cst {dimension_numbers = #tpu.dot_dimension_numbers<[1], [1], [0], [0], [0, 0, 1, 0], [], []>} : vector<2x64xbf16>, vector<128x64xbf16>, vector<2x128xf32> -> vector<2x128xf32>
    %c0_5 = arith.constant 0 : index
    %c0_6 = arith.constant 0 : index
    %5 = vector.load %arg4[%c0_5, %c0_6] : memref<2x1xf32, #tpu.memory_space<vmem>>, vector<2x1xf32>
    %c0_7 = arith.constant 0 : index
    %c0_8 = arith.constant 0 : index
    %6 = vector.load %arg5[%c0_7, %c0_8] : memref<1x128xf32, #tpu.memory_space<vmem>>, vector<1x128xf32>
    %7 = vector.broadcast %6 : vector<1x128xf32> to vector<2x128xf32>
    %8 = vector.broadcast %5 : vector<2x1xf32> to vector<2x128xf32>
    %9 = arith.subf %7, %8 : vector<2x128xf32>
    %10 = math.absf %9 : vector<2x128xf32>
    %11 = vector.broadcast %6 : vector<1x128xf32> to vector<2x128xf32>
    %12 = vector.broadcast %5 : vector<2x1xf32> to vector<2x128xf32>
    %13 = arith.maximumf %11, %12 : vector<2x128xf32>
    %14 = arith.divf %10, %13 : vector<2x128xf32>
    %cst_9 = arith.constant 0.000000e+00 : f32
    %15 = vector.broadcast %cst_9 : f32 to vector<2x128xf32>
    %16 = arith.subf %15, %14 : vector<2x128xf32>
    %cst_10 = arith.constant 1.000000e-01 : f32
    %17 = vector.broadcast %cst_10 : f32 to vector<2x128xf32>
    %18 = arith.mulf %16, %17 : vector<2x128xf32>
    %19 = math.exp %18 : vector<2x128xf32>
    %20 = arith.mulf %4, %19 : vector<2x128xf32>
    %c0_11 = arith.constant 0 : index
    %c0_12 = arith.constant 0 : index
    %c0_13 = arith.constant 0 : index
    %21 = vector.load %arg6[%c0_11, %c0_12, %c0_13] : memref<1x2x128xf32, #tpu.memory_space<vmem>>, vector<1x2x128xf32>
    %22 = vector.shape_cast %21 : vector<1x2x128xf32> to vector<2x128xf32>
    %23 = vector.shape_cast %20 : vector<2x128xf32> to vector<1x2x128xf32>
    tpu.vector_store %arg6[%c0_11, %c0_12, %c0_13], %23 {strides = array<i32>} : memref<1x2x128xf32, #tpu.memory_space<vmem>>, vector<1x2x128xf32>,
    return
  }
  func.func @transform_0(%arg0: i32, %arg1: i32) -> (i32, i32, i32) {
    %c0_i32 = arith.constant 0 : i32
    %c0_i32_0 = arith.constant 0 : i32
    %c0_i32_1 = arith.constant 0 : i32
    return %arg0, %c0_i32, %c0_i32_0 : i32, i32, i32
  }
  func.func @transform_1(%arg0: i32, %arg1: i32) -> (i32, i32, i32) {
    %c0_i32 = arith.constant 0 : i32
    %c0_i32_0 = arith.constant 0 : i32
    return %arg0, %arg1, %c0_i32 : i32, i32, i32
  }
  func.func @transform_2(%arg0: i32, %arg1: i32) -> (i32, i32) {
    %c0_i32 = arith.constant 0 : i32
    %c0_i32_0 = arith.constant 0 : i32
    %c0_i32_1 = arith.constant 0 : i32
    return %c0_i32, %c0_i32_0 : i32, i32
  }
  func.func @transform_3(%arg0: i32, %arg1: i32) -> (i32, i32) {
    %c0_i32 = arith.constant 0 : i32
    %c0_i32_0 = arith.constant 0 : i32
    return %c0_i32, %arg1 : i32, i32
  }
  func.func @transform_4(%arg0: i32, %arg1: i32) -> (i32, i32, i32) {
    %c0_i32 = arith.constant 0 : i32
    %c0_i32_0 = arith.constant 0 : i32
    return %arg0, %c0_i32, %arg1 : i32, i32, i32
  }
}

</mosaic_0001>

<llo_original>
// kernel: tpu_custom_call.1
$region0: #{tpu_custom_call.1}
  #allocation0 [shape = 'u32[]', space=smem, size = 0x4, offset = 0x4, fixed_abs, tag = 'smem constant byte address 0x4 - core index']
  #allocation1 [shape = 'u32[144,128]{1,0:T(1,128)}', space=vmem, size = 0x12000, scoped, tag = 'internal scratch']
  %s0 = inlined_call_operand.vmem [shape: bf16[4,2,64], index: 0, kind: input, shape index: {}]
  %s1 = inlined_call_operand.vmem [shape: bf16[4,128,64], index: 1, kind: input, shape index: {}]
  %s2 = inlined_call_operand.vmem [shape: f32[2,1], index: 2, kind: input, shape index: {}]
  %s3 = inlined_call_operand.vmem [shape: f32[1,128], index: 3, kind: input, shape index: {}]
  %s4 = inlined_call_operand.hbm [shape: f32[4,2,128], index: 4, kind: output, shape index: {}]
  %s5 = sld [smem:[#allocation0]]
  $region49: #{tpu_custom_call.1} parent=0
    _
  %s7 = ssub.s32 1, %s5
  %s8 = scalar_select 0, %s7, %s5
  $region1: #{tpu_custom_call.1} parent=0
    #allocation2 [shape = 'u8[2048]{0}', space=vmem, size = 0x800, scoped, tag = 'output window, operand 0']
    #allocation3 [shape = 's32[2]{0}', space=sflag, size = 0x8, scoped, tag = 'scoped memory for tpu_custom_call.1']
    %9 = vsyncpa [#allocation3], 0
    %s10 = scalar_lea.sflag [#allocation3], 1
    %11 = vsyncpa %s10, 0
    loop: start=0, step=1, limit=6
    $region2: #{tpu_custom_call.1} parent=1 // loop_pre_header
      _
    $region3: #{tpu_custom_call.1} parent=1 // loop_header
      %s13 = sphi 0, %s17
      %p14 = scmp.ge.s32.totalorder %s13, 6
      %s20 = sphi 0, %s32
      %s21 = sphi 0, %s28
      %s22 = sphi 0, %s20
      %s23 = sphi 0, %s21
      %s24 = sphi 0, %s22
      %s25 = sphi 0, %s23
      %s35 = sphi 0, %s37
      %s38 = sphi 0, %s35
      %s39 = sphi 0, %s38
      %s55 = sphi 0, %s39
      %s63 = sphi 0, %s65
      %s66 = sphi 0, %s63
      %s67 = sphi 0, %s66
      %s83 = sphi 0, %s67
      %s87 = sphi 0, %s87
      %s89 = sphi 0, %s87
      %s90 = sphi 0, %s89
      %s104 = sphi 0, %s90
      %s110 = sphi 0, %s112
      %s113 = sphi 0, %s110
      %s114 = sphi 0, %s113
      %s130 = sphi 0, %s114
      %s138 = sphi 0, %s140
      %s141 = sphi 0, %s138
      %s142 = sphi 0, %s141
      %s158 = sphi 0, %s142
    $region4: #{tpu_custom_call.1} parent=1 // loop_header_branch
      %16 = sbr.rel (%p14) target = $region8
    $region5: #{tpu_custom_call.1} parent=1 // loop_body
      %s18 = ssub.s32 %s13, 1
      %s19 = ssub.s32 %s13, 2
      %s26 = sadd.s32 1, %s21
      %p27 = scmp.ge.s32.totalorder %s26, 1
      %s28 = scalar_select %p27, 0, %s26
      %s29 = sadd.s32 1, %s20
      %s30 = scalar_select %p27, %s29, %s20
      %p31 = scmp.ge.s32.totalorder %s30, 4
      %s32 = scalar_select %p31, 0, %s30
      %s33 = ssub.s32 %s20, %s32
      %p34 = scmp.eq.s32.totalorder %s33, 0
      %s36 = sadd.s32 %s35, 1
      %s37 = scalar_select %p34, %s35, %s36
      %p40 = pneg %p34
      %p41 = scmp.eq.s32.totalorder %s13, 3
      %p42 = por %p40, %p41
      %p43 = scmp.ne.s32.totalorder %s35, %s38
      %p44 = scmp.eq.s32.totalorder %s13, 0
      %p45 = por %p43, %p44
      %p46 = scmp.ne.s32.totalorder %s35, %s38
      %p47 = scmp.eq.s32.totalorder %s18, 3
      %p48 = por %p46, %p47
      %p49 = scmp.ne.s32.totalorder %s38, %s39
      %p50 = scmp.eq.s32.totalorder %s18, 0
      %p51 = por %p49, %p50
      %p52 = scmp.ne.s32.totalorder %s38, %s39
      %p53 = scmp.eq.s32.totalorder %s19, 3
      %p54 = por %p52, %p53
      %p56 = scmp.ne.s32.totalorder %s39, %s55
      %p57 = scmp.eq.s32.totalorder %s19, 0
      %p58 = por %p56, %p57
      %s59 = ssub.s32 %s20, %s32
      %s60 = ssub.s32 %s21, %s28
      %s61 = sor.u32 %s59, %s60
      %p62 = scmp.eq.s32.totalorder %s61, 0
      %s64 = sadd.s32 %s63, 1
      %s65 = scalar_select %p62, %s63, %s64
      %p68 = pneg %p62
      %p69 = scmp.eq.s32.totalorder %s13, 3
      %p70 = por %p68, %p69
      %p71 = scmp.ne.s32.totalorder %s63, %s66
      %p72 = scmp.eq.s32.totalorder %s13, 0
      %p73 = por %p71, %p72
      %p74 = scmp.ne.s32.totalorder %s63, %s66
      %p75 = scmp.eq.s32.totalorder %s18, 3
      %p76 = por %p74, %p75
      %p77 = scmp.ne.s32.totalorder %s66, %s67
      %p78 = scmp.eq.s32.totalorder %s18, 0
      %p79 = por %p77, %p78
      %p80 = scmp.ne.s32.totalorder %s66, %s67
      %p81 = scmp.eq.s32.totalorder %s19, 3
      %p82 = por %p80, %p81
      %p84 = scmp.ne.s32.totalorder %s67, %s83
      %p85 = scmp.eq.s32.totalorder %s19, 0
      %p86 = por %p84, %p85
      %s88 = sadd.s32 %s87, 1
      %p91 = scmp.eq.s32.totalorder %s13, 3
      %p92 = scmp.ne.s32.totalorder %s87, %s89
      %p93 = scmp.eq.s32.totalorder %s13, 0
      %p94 = por %p92, %p93
      %p95 = scmp.ne.s32.totalorder %s87, %s89
      %p96 = scmp.eq.s32.totalorder %s18, 3
      %p97 = por %p95, %p96
      %p98 = scmp.ne.s32.totalorder %s89, %s90
      %p99 = scmp.eq.s32.totalorder %s18, 0
      %p100 = por %p98, %p99
      %p101 = scmp.ne.s32.totalorder %s89, %s90
      %p102 = scmp.eq.s32.totalorder %s19, 3
      %p103 = por %p101, %p102
      %p105 = scmp.ne.s32.totalorder %s90, %s104
      %p106 = scmp.eq.s32.totalorder %s19, 0
      %p107 = por %p105, %p106
      %s108 = ssub.s32 %s21, %s28
      %p109 = scmp.eq.s32.totalorder %s108, 0
      %s111 = sadd.s32 %s110, 1
      %s112 = scalar_select %p109, %s110, %s111
      %p115 = pneg %p109
      %p116 = scmp.eq.s32.totalorder %s13, 3
      %p117 = por %p115, %p116
      %p118 = scmp.ne.s32.totalorder %s110, %s113
      %p119 = scmp.eq.s32.totalorder %s13, 0
      %p120 = por %p118, %p119
      %p121 = scmp.ne.s32.totalorder %s110, %s113
      %p122 = scmp.eq.s32.totalorder %s18, 3
      %p123 = por %p121, %p122
      %p124 = scmp.ne.s32.totalorder %s113, %s114
      %p125 = scmp.eq.s32.totalorder %s18, 0
      %p126 = por %p124, %p125
      %p127 = scmp.ne.s32.totalorder %s113, %s114
      %p128 = scmp.eq.s32.totalorder %s19, 3
      %p129 = por %p127, %p128
      %p131 = scmp.ne.s32.totalorder %s114, %s130
      %p132 = scmp.eq.s32.totalorder %s19, 0
      %p133 = por %p131, %p132
      %s134 = ssub.s32 %s20, %s32
      %s135 = ssub.s32 %s21, %s28
      %s136 = sor.u32 %s134, %s135
      %p137 = scmp.eq.s32.totalorder %s136, 0
      %s139 = sadd.s32 %s138, 1
      %s140 = scalar_select %p137, %s138, %s139
      %p143 = pneg %p137
      %p144 = scmp.eq.s32.totalorder %s13, 3
      %p145 = por %p143, %p144
      %p146 = scmp.ne.s32.totalorder %s138, %s141
      %p147 = scmp.eq.s32.totalorder %s13, 0
      %p148 = por %p146, %p147
      %p149 = scmp.ne.s32.totalorder %s138, %s141
      %p150 = scmp.eq.s32.totalorder %s18, 3
      %p151 = por %p149, %p150
      %p152 = scmp.ne.s32.totalorder %s141, %s142
      %p153 = scmp.eq.s32.totalorder %s18, 0
      %p154 = por %p152, %p153
      %p155 = scmp.ne.s32.totalorder %s141, %s142
      %p156 = scmp.eq.s32.totalorder %s19, 3
      %p157 = por %p155, %p156
      %p159 = scmp.ne.s32.totalorder %s142, %s158
      %p160 = scmp.eq.s32.totalorder %s19, 0
      %p161 = por %p159, %p160
      %p162 = scmp.le.s32.totalorder 1, %s13
      %p163 = scmp.lt.s32.totalorder %s13, 5
      %p164 = pnand %p162, %p163
      %p165 = pneg %p164
      // Predicated region
      $region9: #{tpu_custom_call.1} parent=5 // pred_check
        _
      $region10: #{tpu_custom_call.1} parent=5 // pred_check_branch
        %167 = sbr.rel (%p164) target = $region12
      $region11: #{tpu_custom_call.1} parent=5 // pred_region
        %s168 = ssub.s32 %s13, 1
        // Predicated region
        $region13: #{tpu_custom_call.1} parent=11 // pred_check
          %p169 = pneg %p100
        $region14: #{tpu_custom_call.1} parent=11 // pred_check_branch
          %171 = sbr.rel (%p169) target = $region16
        $region15: #{tpu_custom_call.1} parent=11 // pred_region
          _
        $region16: #{tpu_custom_call.1} parent=11 // pred_fallthru
          _
        // Predicated region
        $region17: #{tpu_custom_call.1} parent=11 // pred_check
          %p172 = pneg %p126
        $region18: #{tpu_custom_call.1} parent=11 // pred_check_branch
          %174 = sbr.rel (%p172) target = $region20
        $region19: #{tpu_custom_call.1} parent=11 // pred_region
          %p175 = scmp.lt.s32.totalorder %s23, 0
          %s176 = scalar_select %p175, %s23, 0
          %s177 = scalar_lea.vmem %s3, %s176
        $region20: #{tpu_custom_call.1} parent=11 // pred_fallthru
          _
      $region12: #{tpu_custom_call.1} parent=5 // pred_fallthru
        _
      %p178 = scmp.lt.s32.totalorder %s13, 4
      // Predicated region
      $region21: #{tpu_custom_call.1} parent=5 // pred_check
        %p179 = pneg %p178
      $region22: #{tpu_custom_call.1} parent=5 // pred_check_branch
        %181 = sbr.rel (%p179) target = $region24
      $region23: #{tpu_custom_call.1} parent=5 // pred_region
        // Predicated region
        $region25: #{tpu_custom_call.1} parent=23 // pred_check
          %p182 = pneg %p45
        $region26: #{tpu_custom_call.1} parent=23 // pred_check_branch
          %184 = sbr.rel (%p182) target = $region28
        $region27: #{tpu_custom_call.1} parent=23 // pred_region
          %p185 = scmp.lt.s32.totalorder %s20, 3
          %s186 = scalar_select %p185, %s20, 3
          %s187 = scalar_lea.vmem %s0, %s186
        $region28: #{tpu_custom_call.1} parent=23 // pred_fallthru
          _
        // Predicated region
        $region29: #{tpu_custom_call.1} parent=23 // pred_check
          %p188 = pneg %p73
        $region30: #{tpu_custom_call.1} parent=23 // pred_check_branch
          %190 = sbr.rel (%p188) target = $region32
        $region31: #{tpu_custom_call.1} parent=23 // pred_region
          %s191 = smul.u32 16, %s21
          %p192 = scmp.lt.s32.totalorder %s20, 3
          %s193 = scalar_select %p192, %s20, 3
          %p194 = scmp.lt.s32.totalorder %s191, 15
          %s195 = scalar_select %p194, %s191, 15
          %s196 = smul.addr %s193, 16
          %s197 = sadd.s32 %s195, %s196
          %s198 = smul.addr %s197, 4
          %s199 = scalar_lea.vmem %s1, %s198
          %s200 = smul.u32 16, %s21
        $region32: #{tpu_custom_call.1} parent=23 // pred_fallthru
          _
      $region24: #{tpu_custom_call.1} parent=5 // pred_fallthru
        _
      %p201 = scmp.le.s32.totalorder 1, %s13
      %p202 = scmp.lt.s32.totalorder %s13, 5
      %p203 = pnand %p201, %p202
      %p204 = pneg %p203
      // Predicated region
      $region33: #{tpu_custom_call.1} parent=5 // pred_check
        _
      $region34: #{tpu_custom_call.1} parent=5 // pred_check_branch
        %206 = sbr.rel (%p203) target = $region36
      $region35: #{tpu_custom_call.1} parent=5 // pred_region
        %s207 = ssub.s32 %s13, 1
        %p208 = scmp.lt.s32.totalorder %s22, 3
        %s209 = scalar_select %p208, %s22, 3
        %s210 = scalar_lea.vmem %s0, %s209
        %p211 = pneg %p51
        %p212 = pneg %p48
        %s213 = smul.u32 16, %s23
        %p214 = scmp.lt.s32.totalorder %s22, 3
        %s215 = scalar_select %p214, %s22, 3
        %p216 = scmp.lt.s32.totalorder %s213, 15
        %s217 = scalar_select %p216, %s213, 15
        %s218 = smul.addr %s215, 16
        %s219 = sadd.s32 %s217, %s218
        %s220 = smul.addr %s219, 4
        %s221 = scalar_lea.vmem %s1, %s220
        %p222 = pneg %p79
        %p223 = pneg %p76
        %p224 = pneg %p100
        %p225 = pneg %p97
        %p226 = scmp.lt.s32.totalorder %s23, 0
        %s227 = scalar_select %p226, %s23, 0
        %s228 = scalar_lea.vmem %s3, %s227
        %p229 = pneg %p126
        %p230 = pneg %p123
        %p231 = pneg %p154
        %p232 = pneg %p151
        %s233 = sand.u32 %s141, 1
        %s234 = scalar_lea.sflag [#allocation3], %s233
        %s235 = sand.u32 %s141, 1
        %s236 = smul.addr %s235, 2
        %s237 = scalar_lea.vmem [#allocation2], %s236
        %p238 = scmp.lt.s32.totalorder %s22, 3
        %s239 = scalar_select %p238, %s22, 3
        %s240 = scalar_lea.vmem %s0, %s239
        %s241 = smul.u32 16, %s23
        %p242 = scmp.lt.s32.totalorder %s22, 3
        %s243 = scalar_select %p242, %s22, 3
        %p244 = scmp.lt.s32.totalorder %s241, 15
        %s245 = scalar_select %p244, %s241, 15
        %s246 = smul.addr %s243, 16
        %s247 = sadd.s32 %s245, %s246
        %s248 = smul.addr %s247, 4
        %s249 = scalar_lea.vmem %s1, %s248
        %s250 = smul.u32 16, %s23
        %p251 = scmp.lt.s32.totalorder %s23, 0
        %s252 = scalar_select %p251, %s23, 0
        %s253 = scalar_lea.vmem %s3, %s252
        %v255 = vld [vmem:[%s240] sm:$0x1]
        %v256 = vld [vmem:[%s249] sm:$0xf]
        %v257 = vld [vmem:[%s249 + $0x4] sm:$0xf]
        %v258 = vld [vmem:[%s249 + $0x8] sm:$0xf]
        %v259 = vld [vmem:[%s249 + $0xc] sm:$0xf]
        %v260 = vld [vmem:[%s249 + $0x10] sm:$0xf]
        %v261 = vld [vmem:[%s249 + $0x14] sm:$0xf]
        %v262 = vld [vmem:[%s249 + $0x18] sm:$0xf]
        %v263 = vld [vmem:[%s249 + $0x1c] sm:$0xf]
        %v264 = vld [vmem:[%s249 + $0x20] sm:$0xf]
        %v265 = vld [vmem:[%s249 + $0x24] sm:$0xf]
        %v266 = vld [vmem:[%s249 + $0x28] sm:$0xf]
        %v267 = vld [vmem:[%s249 + $0x2c] sm:$0xf]
        %v268 = vld [vmem:[%s249 + $0x30] sm:$0xf]
        %v269 = vld [vmem:[%s249 + $0x34] sm:$0xf]
        %v270 = vld [vmem:[%s249 + $0x38] sm:$0xf]
        %v271 = vld [vmem:[%s249 + $0x3c] sm:$0xf]
        %v288 = vunpack.c.l.b16 %v256
        %v289 = vunpack.c.l.b16 %v257
        %v290 = vunpack.c.l.b16 %v258
        %v291 = vunpack.c.l.b16 %v259
        %v292 = vunpack.c.l.b16 %v260
        %v293 = vunpack.c.l.b16 %v261
        %v294 = vunpack.c.l.b16 %v262
        %v295 = vunpack.c.l.b16 %v263
        %v296 = vunpack.c.l.b16 %v264
        %v297 = vunpack.c.l.b16 %v265
        %v298 = vunpack.c.l.b16 %v266
        %v299 = vunpack.c.l.b16 %v267
        %v300 = vunpack.c.l.b16 %v268
        %v301 = vunpack.c.l.b16 %v269
        %v302 = vunpack.c.l.b16 %v270
        %v303 = vunpack.c.l.b16 %v271
        %v304 = vpack.c.b16 %v289, %v288
        %v305 = vpack.c.b16 %v291, %v290
        %v306 = vpack.c.b16 %v293, %v292
        %v307 = vpack.c.b16 %v295, %v294
        %v308 = vpack.c.b16 %v297, %v296
        %v309 = vpack.c.b16 %v299, %v298
        %v310 = vpack.c.b16 %v301, %v300
        %v311 = vpack.c.b16 %v303, %v302
        %vm312 = vcmask 523264
        %v314 = vsel %vm312, %v255, 0
        %v317 = vsel %vm312, %v304, 0
        %v320 = vsel %vm312, %v305, 0
        %v323 = vsel %vm312, %v306, 0
        %v326 = vsel %vm312, %v307, 0
        %v329 = vsel %vm312, %v308, 0
        %v332 = vsel %vm312, %v309, 0
        %v335 = vsel %vm312, %v310, 0
        %v338 = vsel %vm312, %v311, 0
        %340 = vmatprep.subr.bf16.mxu0 0
        %341 = vmatpush1.bf16.xpose.msra.mxu0 %v317
        %342 = vmatprep.subr.bf16.mxu0 0
        %343 = vmatpush1.bf16.xpose.msra.mxu0 %v320
        %344 = vmatprep.subr.bf16.mxu0 0
        %345 = vmatpush1.bf16.xpose.msra.mxu0 %v323
        %346 = vmatprep.subr.bf16.mxu0 0
        %347 = vmatpush1.bf16.xpose.msra.mxu0 %v326
        %348 = vmatprep.subr.bf16.mxu0 0
        %349 = vmatpush1.bf16.xpose.msra.mxu0 %v329
        %350 = vmatprep.subr.bf16.mxu0 0
        %351 = vmatpush1.bf16.xpose.msra.mxu0 %v332
        %352 = vmatprep.subr.bf16.mxu0 0
        %353 = vmatpush1.bf16.xpose.msra.mxu0 %v335
        %354 = vmatprep.subr.bf16.mxu0 0
        %355 = vmatpush1.bf16.xpose.msra.mxu0 %v338
        %356 = vmatprep.subr.bf16.mxu0 0
        %357 = vmatpush1.bf16.xpose.msra.mxu0 0
        %358 = vmatprep.subr.bf16.mxu0 0
        %359 = vmatpush1.bf16.xpose.msra.mxu0 0
        %360 = vmatprep.subr.bf16.mxu0 0
        %361 = vmatpush1.bf16.xpose.msra.mxu0 0
        %362 = vmatprep.subr.bf16.mxu0 0
        %363 = vmatpush1.bf16.xpose.msra.mxu0 0
        %364 = vmatprep.subr.bf16.mxu0 0
        %365 = vmatpush1.bf16.xpose.msra.mxu0 0
        %366 = vmatprep.subr.bf16.mxu0 0
        %367 = vmatpush1.bf16.xpose.msra.mxu0 0
        %368 = vmatprep.subr.bf16.mxu0 0
        %369 = vmatpush1.bf16.xpose.msra.mxu0 0
        %370 = vmatprep.subr.bf16.mxu0 0
        %371 = vmatpush1.bf16.xpose.msra.mxu0 0
        %372 = vmatprep.mubr.bf16.mxu0 0
        %373 = vmatmul.mubr.bf16.gmra.mrb[0].mxu0 %v314
        %v374 = vpop.f32.mrb[0].mxu0
        %v375 = vadd.f32 0.0, %v374
        %v376 = vpop.f32.mrb[0].mxu0
        %v377 = vpop.f32.mrb[0].mxu0
        %v378 = vpop.f32.mrb[0].mxu0
        %379 = vdwg.mxu0
        %v380 = vld [vmem:[%s2] sm:$0x3]
        %v381 = vld [vmem:[%s253] sm:$0x1]
        %v383 = vlaneseq
        %v384 = vshrl.u32 %v383, 7
        %v385 = vsub.s32 0, %v384
        %v386 = vrot.slane %v381, %v385
        %389 = vset.pattern.permute.xlu0 0
        %390 = vperm.xlu0 %389, %v380
        %v391 = vpop.permute.xlu0 %390
        %v393 = vsub.f32 %v386, %v391
        %v394 = vand.u32 2147483647, %v393
        %v395 = vmax.f32 %v386, %v391
        %v396 = vrcp.pop %v395
        %v397 = vmul.f32 %v394, %v396
        %v398 = vsub.f32 0.0, %v397
        %v399 = vmul.f32 %v398, 0.1
        %v400 = vmul.f32 %v399, 1.442695
        %v401 = vpow.pop %v400
        %v402 = vmul.f32 %v375, %v401
        %403 = vst [vmem:[%s237] sm:$0x3] %v402
        %s404 = sand.u32 %s141, 1
        %s405 = scalar_lea.sflag [#allocation3], %s404
        %s406 = sand.u32 %s141, 1
        %s407 = smul.addr %s406, 2
        %s408 = scalar_lea.vmem [#allocation2], %s407
        // Predicated region
        $region37: #{tpu_custom_call.1} parent=35 // pred_check
          %p409 = pneg %p151
        $region38: #{tpu_custom_call.1} parent=35 // pred_check_branch
          %411 = sbr.rel (%p409) target = $region40
        $region39: #{tpu_custom_call.1} parent=35 // pred_region
          %s413 = ssub.s32 32, 32
          %414 = vsyncadd %s405, %s413
          %s415 = sadd.s32 %s23, %s22
          %s416 = smul.addr %s415, 32
          %s417 = scalar_lea.hbm %s4, %s416
          %s419 = sshll.u32 %s408, 4
          %s420 = int_to_ptr.vmem [resolvable:$true] %s419
          %422 = dma.vmem_to_hbm [thread:$0]  %s420, 32, %s417, %s405
        $region40: #{tpu_custom_call.1} parent=35 // pred_fallthru
          _
      $region36: #{tpu_custom_call.1} parent=5 // pred_fallthru
        _
      %p423 = scmp.le.s32.totalorder 2, %s13
      // Predicated region
      $region41: #{tpu_custom_call.1} parent=5 // pred_check
        %p424 = pneg %p423
      $region42: #{tpu_custom_call.1} parent=5 // pred_check_branch
        %426 = sbr.rel (%p424) target = $region44
      $region43: #{tpu_custom_call.1} parent=5 // pred_region
        %s427 = ssub.s32 %s13, 2
        // Predicated region
        $region45: #{tpu_custom_call.1} parent=43 // pred_check
          %p428 = pneg %p157
        $region46: #{tpu_custom_call.1} parent=43 // pred_check_branch
          %430 = sbr.rel (%p428) target = $region48
        $region47: #{tpu_custom_call.1} parent=43 // pred_region
          %s431 = sand.u32 %s142, 1
          %s432 = scalar_lea.sflag [#allocation3], %s431
          %s433 = sand.u32 %s142, 1
          %s434 = smul.addr %s433, 2
          %s435 = scalar_lea.vmem [#allocation2], %s434
          %436 = dma.done %s432, 32
        $region48: #{tpu_custom_call.1} parent=43 // pred_fallthru
          _
      $region44: #{tpu_custom_call.1} parent=5 // pred_fallthru
        _
    $region6: #{tpu_custom_call.1} parent=1 // loop_footer
      %s17 = sadd.s32 1, %s13
    $region7: #{tpu_custom_call.1} parent=1 // loop_footer_branch
      %12 = sbr.rel target = $region3
    $region8: #{tpu_custom_call.1} parent=1 // loop_exit
      _
    %437 = vsyncpa [#allocation3], 1
    %s438 = scalar_lea.sflag [#allocation3], 1
    %439 = vsyncpa %s438, 1

</llo_original>
